<compile_context>
chip_gen: v6e
topology: v6e:2x2x1
jax: 0.10.0
libtpu: 0.0.40
codegen_flags: <defaults>
</compile_context>

<pallas_src>
import jax
import jax.numpy as jnp
from jax.experimental import pallas as pl
from jax.experimental.pallas import tpu as pltpu


def _copy_rows_kernel(x_ref, o_ref):
    # (TB, CHW) lane-dense VMEM copy; nothing else to compute for a view op.
    o_ref[...] = x_ref[...]


def _pick_block_rows(N, CHW, itemsize, vmem_budget_bytes=12 * 1024 * 1024):
    """Choose the per-step batch-row tile TB.

    Constraints:
      * TB must be a multiple of 8 (sublane dim) OR equal to the full N.
      * 2 double-buffered input tiles + 2 output tiles must fit the scoped
        VMEM budget (kept under v5e's 16 MiB default).
    """
    if N < 8 or N % 8 != 0:
        # Small / ragged batch: one block covering the whole array
        # (block dim == full array dim satisfies the (8,128) rule).
        return N
    max_rows = max(8, vmem_budget_bytes // (4 * CHW * itemsize))
    for cand in (256, 128, 64, 32, 16, 8):
        if cand <= max_rows and N % cand == 0:
            return cand
    return N


def unflatten(x, C=128, H=7, W=7):
    """x: (N, C*H*W) -> (N, C, H, W), matching torch .view semantics."""
    N, CHW = x.shape
    assert CHW == C * H * W, f"expected last dim {C * H * W}, got {CHW}"

    TB = _pick_block_rows(N, CHW, x.dtype.itemsize)
    grid = (N // TB,)

    flat = pl.pallas_call(
        _copy_rows_kernel,
        out_shape=jax.ShapeDtypeStruct((N, CHW), x.dtype),
        grid=grid,
        in_specs=[pl.BlockSpec((TB, CHW), lambda i: (i, 0))],
        out_specs=pl.BlockSpec((TB, CHW), lambda i: (i, 0)),
        compiler_params=pltpu.CompilerParams(
            dimension_semantics=("parallel",),
        ),
    )(x)

    # Row-major reshape == torch .view(N, C, H, W); free metadata op in XLA.
    return jnp.reshape(flat, (N, C, H, W))


def unflatten_reference(x, C=128, H=7, W=7):
    """The truly optimal implementation: no kernel, just a view."""
    N = x.shape[0]
    return jnp.reshape(x, (N, C, H, W))


if __name__ == "__main__":
    # Module defaults: C=128, H=7, W=7; small batch N=2.
    N, C, H, W = 2, 128, 7, 7
    key = jax.random.PRNGKey(0)
    x = jax.random.normal(key, (N, C * H * W), dtype=jnp.float32)

    ref = unflatten_reference(x, C=C, H=H, W=W)

    out = unflatten(x, C=C, H=H, W=W)
    out = jax.block_until_ready(out)

    assert out.shape == (N, C, H, W)
    assert out.dtype == x.dtype
    assert bool(jnp.array_equal(out, ref))

    print("KERNEL_OK")
</pallas_src>

<mosaic_0001>
module attributes {stable_mosaic.version = 11 : i64} {
  func.func @_copy_rows_kernel(%arg0: i32, %arg1: memref<2x6272xf32, #tpu.memory_space<vmem>>, %arg2: memref<2x6272xf32, #tpu.memory_space<vmem>>) attributes {dimension_semantics = [#tpu.dimension_semantics<parallel>], iteration_bounds = array<i64: 1>, scalar_prefetch = 0 : i64, scratch_operands = 0 : i64, tpu.core_type = #tpu.core_type<tc>, window_params = [{transform_indices = @transform_0, window_bounds = array<i64: 2, 6272>}, {transform_indices = @transform_1, window_bounds = array<i64: 2, 6272>}]} {
    %c0 = arith.constant 0 : index
    %c0_0 = arith.constant 0 : index
    %0 = vector.load %arg1[%c0, %c0_0] : memref<2x6272xf32, #tpu.memory_space<vmem>>, vector<2x6272xf32>
    %c0_1 = arith.constant 0 : index
    %c0_2 = arith.constant 0 : index
    %1 = vector.load %arg2[%c0_1, %c0_2] : memref<2x6272xf32, #tpu.memory_space<vmem>>, vector<2x6272xf32>
    tpu.vector_store %arg2[%c0_1, %c0_2], %0 {strides = array<i32>} : memref<2x6272xf32, #tpu.memory_space<vmem>>, vector<2x6272xf32>,
    return
  }
  func.func @transform_0(%arg0: i32) -> (i32, i32) {
    %c0_i32 = arith.constant 0 : i32
    %c0_i32_0 = arith.constant 0 : i32
    return %arg0, %c0_i32 : i32, i32
  }
  func.func @transform_1(%arg0: i32) -> (i32, i32) {
    %c0_i32 = arith.constant 0 : i32
    %c0_i32_0 = arith.constant 0 : i32
    return %arg0, %c0_i32 : i32, i32
  }
}

</mosaic_0001>

<llo_original>
// kernel: tpu_custom_call.1
$region0: #{tpu_custom_call.1}
  #allocation0 [shape = 'u32[]', space=smem, size = 0x4, offset = 0x4, fixed_abs, tag = 'smem constant byte address 0x4 - core index']
  #allocation1 [shape = 'u32[144,128]{1,0:T(1,128)}', space=vmem, size = 0x12000, scoped, tag = 'internal scratch']
  %s0 = inlined_call_operand.hbm [shape: f32[2,6272], index: 0, kind: input, shape index: {}]
  %s1 = inlined_call_operand.hbm [shape: f32[2,6272], index: 1, kind: output, shape index: {}]
  %s2 = sld [smem:[#allocation0]]
  $region18: #{tpu_custom_call.1} parent=0
    _
  %s4 = ssub.s32 1, %s2
  %s5 = scalar_select 0, %s4, %s2
  $region1: #{tpu_custom_call.1} parent=0
    #allocation2 [shape = 'u8[50176]{0}', space=vmem, size = 0xc400, scoped, tag = 'input window, operand 0, single buffered']
    #allocation3 [shape = 's32[1]{0}', space=sflag, size = 0x4, scoped, tag = 'scoped memory for tpu_custom_call.1']
    #allocation4 [shape = 's32[1]{0}', space=sflag, size = 0x4, scoped, tag = 'scoped memory for tpu_custom_call.1']
    #allocation5 [shape = 'u8[50176]{0}', space=vmem, size = 0xc400, scoped, tag = 'output window, operand 0, single buffered']
    %6 = vsyncpa [#allocation3], 0
    %7 = vsyncpa [#allocation4], 0
    // Predicated region
    $region2: #{tpu_custom_call.1} parent=1 // pred_check
      _
    $region3: #{tpu_custom_call.1} parent=1 // pred_check_branch
      %9 = sbr.rel (0) target = $region5
    $region4: #{tpu_custom_call.1} parent=1 // pred_region
      %s11 = ssub.s32 1568, 1568
      %12 = vsyncadd [#allocation3], %s11
      %s14 = sshll.u32 [#allocation2], 4
      %s15 = int_to_ptr.vmem [resolvable:$true] %s14
      %17 = dma.hbm_to_vmem [thread:$0]  %s0, 1568, %s15, [#allocation3]
    $region5: #{tpu_custom_call.1} parent=1 // pred_fallthru
      _
    // Predicated region
    $region6: #{tpu_custom_call.1} parent=1 // pred_check
      _
    $region7: #{tpu_custom_call.1} parent=1 // pred_check_branch
      %19 = sbr.rel (0) target = $region9
    $region8: #{tpu_custom_call.1} parent=1 // pred_region
      %20 = dma.done [#allocation3], 1568
    $region9: #{tpu_custom_call.1} parent=1 // pred_fallthru
      _
    %v21 = vld [vmem:[#allocation2] sm:$0xff]
    %v22 = vld [vmem:[#allocation2 + $0x8] sm:$0xff]
    %v23 = vld [vmem:[#allocation2 + $0x10] sm:$0xff]
    %v24 = vld [vmem:[#allocation2 + $0x18] sm:$0xff]
    %v25 = vld [vmem:[#allocation2 + $0x20] sm:$0xff]
    %v26 = vld [vmem:[#allocation2 + $0x28] sm:$0xff]
    %v27 = vld [vmem:[#allocation2 + $0x30] sm:$0xff]
    %v28 = vld [vmem:[#allocation2 + $0x38] sm:$0xff]
    %v29 = vld [vmem:[#allocation2 + $0x40] sm:$0xff]
    %v30 = vld [vmem:[#allocation2 + $0x48] sm:$0xff]
    %v31 = vld [vmem:[#allocation2 + $0x50] sm:$0xff]
    %v32 = vld [vmem:[#allocation2 + $0x58] sm:$0xff]
    %v33 = vld [vmem:[#allocation2 + $0x60] sm:$0x3]
    %34 = vst [vmem:[#allocation5] sm:$0xff] %v21
    %35 = vst [vmem:[#allocation5 + $0x8] sm:$0xff] %v22
    %36 = vst [vmem:[#allocation5 + $0x10] sm:$0xff] %v23
    %37 = vst [vmem:[#allocation5 + $0x18] sm:$0xff] %v24
    %38 = vst [vmem:[#allocation5 + $0x20] sm:$0xff] %v25
    %39 = vst [vmem:[#allocation5 + $0x28] sm:$0xff] %v26
    %40 = vst [vmem:[#allocation5 + $0x30] sm:$0xff] %v27
    %41 = vst [vmem:[#allocation5 + $0x38] sm:$0xff] %v28
    %42 = vst [vmem:[#allocation5 + $0x40] sm:$0xff] %v29
    %43 = vst [vmem:[#allocation5 + $0x48] sm:$0xff] %v30
    %44 = vst [vmem:[#allocation5 + $0x50] sm:$0xff] %v31
    %45 = vst [vmem:[#allocation5 + $0x58] sm:$0xff] %v32
    %46 = vst [vmem:[#allocation5 + $0x60] sm:$0x3] %v33
    // Predicated region
    $region10: #{tpu_custom_call.1} parent=1 // pred_check
      _
    $region11: #{tpu_custom_call.1} parent=1 // pred_check_branch
      %48 = sbr.rel (0) target = $region13
    $region12: #{tpu_custom_call.1} parent=1 // pred_region
      %s50 = ssub.s32 1568, 1568
      %51 = vsyncadd [#allocation4], %s50
      %s53 = sshll.u32 [#allocation5], 4
      %s54 = int_to_ptr.vmem [resolvable:$true] %s53
      %56 = dma.vmem_to_hbm [thread:$0]  %s54, 1568, %s1, [#allocation4]
    $region13: #{tpu_custom_call.1} parent=1 // pred_fallthru
      _
    // Predicated region
    $region14: #{tpu_custom_call.1} parent=1 // pred_check
      _
    $region15: #{tpu_custom_call.1} parent=1 // pred_check_branch
      %58 = sbr.rel (0) target = $region17
    $region16: #{tpu_custom_call.1} parent=1 // pred_region
      %59 = dma.done [#allocation4], 1568
    $region17: #{tpu_custom_call.1} parent=1 // pred_fallthru
      _
    %60 = vsyncpa [#allocation3], 1
    %61 = vsyncpa [#allocation4], 1

</llo_original>
